<compile_context>
chip_gen: v7x
topology: tpu7x:2x2x1
jax: 0.10.0
libtpu: 0.0.40
codegen_flags: <defaults>
</compile_context>

<pallas_src>
import jax
import jax.numpy as jnp
from jax.experimental import pallas as pl
from jax.experimental.pallas import tpu as pltpu

_LANE = 1024                      # lane-dense slab width (multiple of 128)
_TARGET_TILE_BYTES = 2 * 1024 * 1024  # ~2 MiB per tile; safe on v5e/v6e/v7x


def _identity_kernel(x_ref, o_ref):
    # Pure element-wise passthrough on the current VMEM tile.
    o_ref[...] = x_ref[...]


def _round_up(a, b):
    return ((a + b - 1) // b) * b


def _sublane_for_dtype(dtype):
    itemsize = jnp.dtype(dtype).itemsize
    # Minimum sublane tile for packed dtypes: 8 for 32-bit, 16 for 16-bit,
    # 32 for 8-bit.
    return max(8, 32 // itemsize)


def visual_flow_transformer_forward(x):
    """Identity forward of VisualFlowTransformer via a Pallas copy kernel.

    x: jnp.ndarray of arbitrary shape (e.g. NCHW). Returns an array of
    identical shape/dtype whose values equal x.
    """
    orig_shape = x.shape
    dtype = x.dtype
    itemsize = jnp.dtype(dtype).itemsize
    total = int(x.size)

    sublane = _sublane_for_dtype(dtype)

    # Rows of a LANE-wide slab needed to hold all elements.
    rows_needed = pl.cdiv(total, _LANE)

    # Largest row-tile that (a) stays around the 2 MiB target and (b) is a
    # multiple of the dtype's sublane packing.
    tile_rows = max(sublane, (_TARGET_TILE_BYTES // (_LANE * itemsize)))
    tile_rows = _round_up(tile_rows, sublane)
    # Don't use a tile bigger than the (sublane-rounded) data itself.
    tile_rows = min(tile_rows, _round_up(rows_needed, sublane))

    rows_padded = _round_up(rows_needed, tile_rows)
    padded_elems = rows_padded * _LANE

    # Flatten + pad the tail so the slab tiles evenly; sliced off afterwards.
    flat = x.reshape(-1)
    if padded_elems != total:
        flat = jnp.pad(flat, (0, padded_elems - total))
    x2d = flat.reshape(rows_padded, _LANE)

    grid = (rows_padded // tile_rows,)
    bytes_moved = 2 * padded_elems * itemsize  # read + write

    out2d = pl.pallas_call(
        _identity_kernel,
        out_shape=jax.ShapeDtypeStruct((rows_padded, _LANE), dtype),
        grid_spec=pltpu.PrefetchScalarGridSpec(
            num_scalar_prefetch=0,
            grid=grid,
            in_specs=[pl.BlockSpec((tile_rows, _LANE), lambda i: (i, 0))],
            out_specs=pl.BlockSpec((tile_rows, _LANE), lambda i: (i, 0)),
        ),
        compiler_params=pltpu.CompilerParams(
            dimension_semantics=("parallel",),
        ),
        cost_estimate=pl.CostEstimate(
            flops=0, transcendentals=0, bytes_accessed=bytes_moved
        ),
    )(x2d)

    out_flat = out2d.reshape(-1)
    if padded_elems != total:
        out_flat = out_flat[:total]
    return out_flat.reshape(orig_shape)


# The module declares no parameters in __init__, so there is nothing to
# initialize; kept here for parity with the PyTorch class structure.
class VisualFlowTransformerPallas:
    def __init__(self):
        pass

    def get_spatial_embed(self, x):
        return x

    def get_optical_flow(self, x):
        return x

    def __call__(self, x):
        return visual_flow_transformer_forward(x)


if __name__ == "__main__":
    key = jax.random.PRNGKey(0)
    # Small NCHW input consistent with a video/vision transformer front-end.
    x = jax.random.normal(key, (2, 4, 16, 16), dtype=jnp.float32)

    model = VisualFlowTransformerPallas()
    y = model(x)
    y = jax.block_until_ready(y)

    # Forward is identity: verify exact match.
    assert y.shape == x.shape and y.dtype == x.dtype
    assert bool(jnp.all(y == x))

    # Also exercise a shape whose element count does not divide the slab,
    # and a bf16 input, to check the padded / packed-dtype paths.
    x2 = jax.random.normal(key, (3, 5, 7, 11), dtype=jnp.bfloat16)
    y2 = jax.block_until_ready(model(x2))
    assert y2.shape == x2.shape and y2.dtype == x2.dtype
    assert bool(jnp.all(y2 == x2))

    print("KERNEL_OK")
</pallas_src>

<mosaic_0001>
module attributes {stable_mosaic.version = 11 : i64} {
  func.func @_identity_kernel(%arg0: i32, %arg1: memref<8x1024xf32, #tpu.memory_space<vmem>>, %arg2: memref<8x1024xf32, #tpu.memory_space<vmem>>) attributes {dimension_semantics = [#tpu.dimension_semantics<parallel>], iteration_bounds = array<i64: 1>, scalar_prefetch = 0 : i64, scratch_operands = 0 : i64, tpu.core_type = #tpu.core_type<tc>, window_params = [{transform_indices = @transform_0, window_bounds = array<i64: 8, 1024>}, {transform_indices = @transform_1, window_bounds = array<i64: 8, 1024>}]} {
    %c0 = arith.constant 0 : index
    %c0_0 = arith.constant 0 : index
    %0 = vector.load %arg1[%c0, %c0_0] : memref<8x1024xf32, #tpu.memory_space<vmem>>, vector<8x1024xf32>
    %c0_1 = arith.constant 0 : index
    %c0_2 = arith.constant 0 : index
    %1 = vector.load %arg2[%c0_1, %c0_2] : memref<8x1024xf32, #tpu.memory_space<vmem>>, vector<8x1024xf32>
    tpu.vector_store %arg2[%c0_1, %c0_2], %0 {strides = array<i32>} : memref<8x1024xf32, #tpu.memory_space<vmem>>, vector<8x1024xf32>,
    return
  }
  func.func @transform_0(%arg0: i32) -> (i32, i32) {
    %c0_i32 = arith.constant 0 : i32
    %c0_i32_0 = arith.constant 0 : i32
    return %arg0, %c0_i32 : i32, i32
  }
  func.func @transform_1(%arg0: i32) -> (i32, i32) {
    %c0_i32 = arith.constant 0 : i32
    %c0_i32_0 = arith.constant 0 : i32
    return %arg0, %c0_i32 : i32, i32
  }
}

</mosaic_0001>

<llo_original>
// kernel: tpu_custom_call.1
$region0: #{tpu_custom_call.1}
  #allocation0 [shape = 'u32[]', space=smem, size = 0x4, offset = 0x4, fixed_abs, tag = 'smem constant byte address 0x4 - core index']
  #allocation1 [shape = 'u32[144,128]{1,0:T(1,128)}', space=vmem, size = 0x12000, scoped, tag = 'internal scratch']
  %s0 = inlined_call_operand.hbm [shape: f32[8,1024], index: 0, kind: input, shape index: {}]
  %s1 = inlined_call_operand.hbm [shape: f32[8,1024], index: 1, kind: output, shape index: {}]
  %s2 = sld [smem:[#allocation0]]
  $region18: #{tpu_custom_call.1} parent=0
    _
  %s4 = ssub.s32 1, %s2
  %s5 = scalar_select 0, %s4, %s2
  $region1: #{tpu_custom_call.1} parent=0
    #allocation2 [shape = 'u8[32768]{0}', space=vmem, size = 0x8000, scoped, tag = 'input window, operand 0, single buffered']
    #allocation3 [shape = 's32[1]{0}', space=sflag, size = 0x4, scoped, tag = 'scoped memory for tpu_custom_call.1']
    #allocation4 [shape = 's32[1]{0}', space=sflag, size = 0x4, scoped, tag = 'scoped memory for tpu_custom_call.1']
    #allocation5 [shape = 'u8[32768]{0}', space=vmem, size = 0x8000, scoped, tag = 'output window, operand 0, single buffered']
    %6 = vsyncpa [#allocation3], 0
    %7 = vsyncpa [#allocation4], 0
    // Predicated region
    $region2: #{tpu_custom_call.1} parent=1 // pred_check
      _
    $region3: #{tpu_custom_call.1} parent=1 // pred_check_branch
      %9 = sbr.rel (0) target = $region5
    $region4: #{tpu_custom_call.1} parent=1 // pred_region
      %s11 = ssub.s32 1024, 1024
      %12 = vsyncadd [#allocation3], %s11
      %s14 = sshll.u32 [#allocation2], 4
      %s15 = int_to_ptr.vmem [resolvable:$true] %s14
      %17 = dma.hbm_to_vmem [thread:$0]  %s0, 1024, %s15, [#allocation3]
    $region5: #{tpu_custom_call.1} parent=1 // pred_fallthru
      _
    // Predicated region
    $region6: #{tpu_custom_call.1} parent=1 // pred_check
      _
    $region7: #{tpu_custom_call.1} parent=1 // pred_check_branch
      %19 = sbr.rel (0) target = $region9
    $region8: #{tpu_custom_call.1} parent=1 // pred_region
      %20 = dma.done [#allocation3], 1024
    $region9: #{tpu_custom_call.1} parent=1 // pred_fallthru
      _
    %v21 = vld [vmem:[#allocation2] sm:$0xff]
    %v22 = vld [vmem:[#allocation2 + $0x8] sm:$0xff]
    %v23 = vld [vmem:[#allocation2 + $0x10] sm:$0xff]
    %v24 = vld [vmem:[#allocation2 + $0x18] sm:$0xff]
    %v25 = vld [vmem:[#allocation2 + $0x20] sm:$0xff]
    %v26 = vld [vmem:[#allocation2 + $0x28] sm:$0xff]
    %v27 = vld [vmem:[#allocation2 + $0x30] sm:$0xff]
    %v28 = vld [vmem:[#allocation2 + $0x38] sm:$0xff]
    %29 = vst [vmem:[#allocation5] sm:$0xff] %v21
    %30 = vst [vmem:[#allocation5 + $0x8] sm:$0xff] %v22
    %31 = vst [vmem:[#allocation5 + $0x10] sm:$0xff] %v23
    %32 = vst [vmem:[#allocation5 + $0x18] sm:$0xff] %v24
    %33 = vst [vmem:[#allocation5 + $0x20] sm:$0xff] %v25
    %34 = vst [vmem:[#allocation5 + $0x28] sm:$0xff] %v26
    %35 = vst [vmem:[#allocation5 + $0x30] sm:$0xff] %v27
    %36 = vst [vmem:[#allocation5 + $0x38] sm:$0xff] %v28
    // Predicated region
    $region10: #{tpu_custom_call.1} parent=1 // pred_check
      _
    $region11: #{tpu_custom_call.1} parent=1 // pred_check_branch
      %38 = sbr.rel (0) target = $region13
    $region12: #{tpu_custom_call.1} parent=1 // pred_region
      %s40 = ssub.s32 1024, 1024
      %41 = vsyncadd [#allocation4], %s40
      %s43 = sshll.u32 [#allocation5], 4
      %s44 = int_to_ptr.vmem [resolvable:$true] %s43
      %46 = dma.vmem_to_hbm [thread:$0]  %s44, 1024, %s1, [#allocation4]
    $region13: #{tpu_custom_call.1} parent=1 // pred_fallthru
      _
    // Predicated region
    $region14: #{tpu_custom_call.1} parent=1 // pred_check
      _
    $region15: #{tpu_custom_call.1} parent=1 // pred_check_branch
      %48 = sbr.rel (0) target = $region17
    $region16: #{tpu_custom_call.1} parent=1 // pred_region
      %49 = dma.done [#allocation4], 1024
    $region17: #{tpu_custom_call.1} parent=1 // pred_fallthru
      _
    %50 = vsyncpa [#allocation3], 1
    %51 = vsyncpa [#allocation4], 1

</llo_original>
